<compile_context>
chip_gen: v6e
topology: v6e:2x2x1
jax: 0.10.0
libtpu: 0.0.40
codegen_flags: <defaults>
</compile_context>

<pallas_src>
import functools

import jax
import jax.numpy as jnp
from jax.experimental import pallas as pl
from jax.experimental.pallas import tpu as pltpu


# Logical (PyTorch) dims and padded (TPU-friendly) dims.
IN_F, HID_F, OUT_F = 100, 200, 10
IN_P, HID_P, OUT_P = 128, 256, 128
NEG_INF = -1e30


def tiny_model_kernel(x_ref, w1_ref, b1_ref, w2_ref, b2_ref, o_ref, xpad_ref):
    tb = xpad_ref.shape[0]
    # Build an aligned (tb, 128) bf16 LHS in VMEM: zero the K-padding lanes
    # every step (cheap, and safe under megacore grid sharding), then cast the
    # streamed f32 activations into the first 100 lanes.
    xpad_ref[:, IN_F:] = jnp.zeros((tb, IN_P - IN_F), jnp.bfloat16)
    xpad_ref[:, :IN_F] = x_ref[...].astype(jnp.bfloat16)

    # linear1: (tb,128)bf16 @ (128,256)bf16 -> f32, bias + ReLU in f32.
    h = jnp.dot(xpad_ref[...], w1_ref[...], preferred_element_type=jnp.float32)
    h = jnp.maximum(h + b1_ref[...], 0.0)

    # linear2: (tb,256)bf16 @ (256,128)bf16 -> f32, bias in f32.
    # Padded lanes (10..127) get bias -1e30 -> exp underflows to exactly 0.
    logits = jnp.dot(h.astype(jnp.bfloat16), w2_ref[...],
                     preferred_element_type=jnp.float32) + b2_ref[...]

    # Numerically stable softmax over all 128 lanes; normalization via EUP.
    m = jnp.max(logits, axis=-1, keepdims=True)
    e = jnp.exp(logits - m)
    s = jnp.sum(e, axis=-1, keepdims=True)
    o_ref[...] = (e * pl.reciprocal(s, approx=True)).astype(o_ref.dtype)


def _round_up(n, m):
    return ((n + m - 1) // m) * m


@functools.partial(jax.jit, static_argnames=("max_tile",))
def tiny_model_forward(x, w1, b1, w2, b2, *, max_tile=2048):
    """x: (B, 100) f32.  Weights/biases are pre-padded (see init_params)."""
    B = x.shape[0]

    # Batch tile: multiple of 16 (bf16 sublane packing), as large as possible
    # up to max_tile (HBM-pipeline efficiency), but split so a big batch never
    # collapses to a single grid step (keeps both v7x TensorCores busy).
    b16 = max(16, _round_up(B, 16))
    tb = min(max_tile, b16)
    if pl.cdiv(B, tb) == 1 and b16 >= 512:
        tb = _round_up(pl.cdiv(b16, 2), 16)

    grid = (pl.cdiv(B, tb),)

    flops = 2 * B * (IN_P * HID_P + HID_P * OUT_P)
    bytes_accessed = (B * IN_F * 4 + B * OUT_P * 2
                      + (IN_P * HID_P + HID_P * OUT_P) * 2
                      + (HID_P + OUT_P) * 4)
    cost = pl.CostEstimate(flops=flops,
                           transcendentals=B * OUT_P,
                           bytes_accessed=bytes_accessed)

    out = pl.pallas_call(
        tiny_model_kernel,
        out_shape=jax.ShapeDtypeStruct((B, OUT_P), jnp.bfloat16),
        grid_spec=pltpu.PrefetchScalarGridSpec(
            num_scalar_prefetch=0,
            grid=grid,
            in_specs=[
                # Activations stream per grid step, f32, unpadded K.
                pl.BlockSpec((tb, IN_F), lambda i: (i, 0)),
                # Weights / biases: constant block index -> fetched once,
                # stay resident in VMEM across all grid steps.
                pl.BlockSpec((IN_P, HID_P), lambda i: (0, 0)),
                pl.BlockSpec((1, HID_P), lambda i: (0, 0)),
                pl.BlockSpec((HID_P, OUT_P), lambda i: (0, 0)),
                pl.BlockSpec((1, OUT_P), lambda i: (0, 0)),
            ],
            out_specs=pl.BlockSpec((tb, OUT_P), lambda i: (i, 0)),
            scratch_shapes=[pltpu.VMEM((tb, IN_P), jnp.bfloat16)],
        ),
        compiler_params=pltpu.CompilerParams(
            dimension_semantics=("parallel",),
            vmem_limit_bytes=32 * 1024 * 1024),
        cost_estimate=cost,
    )(x, w1, b1, w2, b2)

    # Slice away the 118 padded (zero-probability) lanes; return f32 to match
    # the PyTorch module's output dtype.
    return out[:, :OUT_F].astype(jnp.float32)


def init_params(key):
    """Deterministic params matching torch.nn.Linear init, stored transposed
    as (in, out), zero-padded to TPU-friendly shapes and cast for the MXU:
      w1: (128, 256) bf16   b1: (1, 256) f32
      w2: (256, 128) bf16   b2: (1, 128) f32  (padded lanes = -1e30)
    """
    k1, k2, k3, k4 = jax.random.split(key, 4)
    bound1 = 1.0 / jnp.sqrt(float(IN_F))
    bound2 = 1.0 / jnp.sqrt(float(HID_F))
    w1_raw = jax.random.uniform(k1, (IN_F, HID_F), jnp.float32, -bound1, bound1)
    b1_raw = jax.random.uniform(k2, (HID_F,), jnp.float32, -bound1, bound1)
    w2_raw = jax.random.uniform(k3, (HID_F, OUT_F), jnp.float32, -bound2, bound2)
    b2_raw = jax.random.uniform(k4, (OUT_F,), jnp.float32, -bound2, bound2)

    w1 = jnp.zeros((IN_P, HID_P), jnp.float32).at[:IN_F, :HID_F].set(w1_raw)
    b1 = jnp.zeros((1, HID_P), jnp.float32).at[0, :HID_F].set(b1_raw)
    w2 = jnp.zeros((HID_P, OUT_P), jnp.float32).at[:HID_F, :OUT_F].set(w2_raw)
    b2 = jnp.full((1, OUT_P), NEG_INF, jnp.float32).at[0, :OUT_F].set(b2_raw)

    params = (w1.astype(jnp.bfloat16), b1, w2.astype(jnp.bfloat16), b2)
    raw = (w1_raw, b1_raw, w2_raw, b2_raw)
    return params, raw


def reference_forward(x, raw):
    """Pure-JAX f32 reference matching the PyTorch module."""
    w1_raw, b1_raw, w2_raw, b2_raw = raw
    h = jnp.maximum(x @ w1_raw + b1_raw, 0.0)
    logits = h @ w2_raw + b2_raw
    return jax.nn.softmax(logits, axis=-1)


if __name__ == "__main__":
    key = jax.random.PRNGKey(0)
    k_params, k_x = jax.random.split(key)
    params, raw = init_params(k_params)

    B = 8  # small batch
    x = jax.random.normal(k_x, (B, IN_F), jnp.float32)

    out = tiny_model_forward(x, *params)
    out = jax.block_until_ready(out)

    # Sanity: shape, softmax rows sum to ~1 (approx reciprocal + bf16 output),
    # and agreement with the f32 reference within bf16-level tolerance.
    assert out.shape == (B, OUT_F)
    assert jnp.allclose(jnp.sum(out, axis=-1), 1.0, atol=1e-2)
    ref = reference_forward(x, raw)
    assert jnp.allclose(out, ref, atol=5e-2)

    print("KERNEL_OK")
</pallas_src>

<mosaic_0001>
module attributes {stable_mosaic.version = 11 : i64} {
  func.func @tiny_model_kernel(%arg0: i32, %arg1: memref<16x100xf32, #tpu.memory_space<vmem>>, %arg2: memref<128x256xbf16, #tpu.memory_space<vmem>>, %arg3: memref<1x256xf32, #tpu.memory_space<vmem>>, %arg4: memref<256x128xbf16, #tpu.memory_space<vmem>>, %arg5: memref<1x128xf32, #tpu.memory_space<vmem>>, %arg6: memref<16x128xbf16, #tpu.memory_space<vmem>>, %arg7: memref<16x128xbf16, #tpu.memory_space<vmem>>) attributes {dimension_semantics = [#tpu.dimension_semantics<parallel>], iteration_bounds = array<i64: 1>, scalar_prefetch = 0 : i64, scratch_operands = 1 : i64, tpu.core_type = #tpu.core_type<tc>, window_params = [{transform_indices = @transform_0, window_bounds = array<i64: 16, 100>}, {pipeline_mode = #tpu.pipeline_mode<synchronous>, transform_indices = @transform_1, window_bounds = array<i64: 128, 256>}, {pipeline_mode = #tpu.pipeline_mode<synchronous>, transform_indices = @transform_2, window_bounds = array<i64: 1, 256>}, {pipeline_mode = #tpu.pipeline_mode<synchronous>, transform_indices = @transform_3, window_bounds = array<i64: 256, 128>}, {pipeline_mode = #tpu.pipeline_mode<synchronous>, transform_indices = @transform_4, window_bounds = array<i64: 1, 128>}, {transform_indices = @transform_5, window_bounds = array<i64: 16, 128>}]} {
    %cst = arith.constant 0.000000e+00 : bf16
    %0 = vector.broadcast %cst : bf16 to vector<16x28xbf16>
    %c0 = arith.constant 0 : index
    %c100 = arith.constant 100 : index
    %1 = vector.load %arg7[%c0, %c100] : memref<16x128xbf16, #tpu.memory_space<vmem>>, vector<16x28xbf16>
    tpu.vector_store %arg7[%c0, %c100], %0 {strides = array<i32>} : memref<16x128xbf16, #tpu.memory_space<vmem>>, vector<16x28xbf16>,
    %c0_0 = arith.constant 0 : index
    %c0_1 = arith.constant 0 : index
    %2 = vector.load %arg1[%c0_0, %c0_1] : memref<16x100xf32, #tpu.memory_space<vmem>>, vector<16x100xf32>
    %3 = arith.truncf %2 : vector<16x100xf32> to vector<16x100xbf16>
    %c0_2 = arith.constant 0 : index
    %c0_3 = arith.constant 0 : index
    %4 = vector.load %arg7[%c0_2, %c0_3] : memref<16x128xbf16, #tpu.memory_space<vmem>>, vector<16x100xbf16>
    tpu.vector_store %arg7[%c0_2, %c0_3], %3 {strides = array<i32>} : memref<16x128xbf16, #tpu.memory_space<vmem>>, vector<16x100xbf16>,
    %c0_4 = arith.constant 0 : index
    %c0_5 = arith.constant 0 : index
    %5 = vector.load %arg7[%c0_4, %c0_5] : memref<16x128xbf16, #tpu.memory_space<vmem>>, vector<16x128xbf16>
    %c0_6 = arith.constant 0 : index
    %c0_7 = arith.constant 0 : index
    %6 = vector.load %arg2[%c0_6, %c0_7] : memref<128x256xbf16, #tpu.memory_space<vmem>>, vector<128x256xbf16>
    %cst_8 = arith.constant dense<0.000000e+00> : vector<16x256xf32>
    %7 = tpu.matmul %5, %6, %cst_8 {dimension_numbers = #tpu.dot_dimension_numbers<[1], [0], [0], [1], [0, 0, 1, 1], [], []>} : vector<16x128xbf16>, vector<128x256xbf16>, vector<16x256xf32> -> vector<16x256xf32>
    %c0_9 = arith.constant 0 : index
    %c0_10 = arith.constant 0 : index
    %8 = vector.load %arg3[%c0_9, %c0_10] : memref<1x256xf32, #tpu.memory_space<vmem>>, vector<1x256xf32>
    %9 = vector.broadcast %8 : vector<1x256xf32> to vector<16x256xf32>
    %10 = arith.addf %7, %9 : vector<16x256xf32>
    %cst_11 = arith.constant 0.000000e+00 : f32
    %11 = vector.broadcast %cst_11 : f32 to vector<16x256xf32>
    %12 = arith.maximumf %10, %11 : vector<16x256xf32>
    %13 = arith.truncf %12 : vector<16x256xf32> to vector<16x256xbf16>
    %c0_12 = arith.constant 0 : index
    %c0_13 = arith.constant 0 : index
    %14 = vector.load %arg4[%c0_12, %c0_13] : memref<256x128xbf16, #tpu.memory_space<vmem>>, vector<256x128xbf16>
    %cst_14 = arith.constant dense<0.000000e+00> : vector<16x128xf32>
    %15 = tpu.matmul %13, %14, %cst_14 {dimension_numbers = #tpu.dot_dimension_numbers<[1], [0], [0], [1], [0, 0, 1, 1], [], []>} : vector<16x256xbf16>, vector<256x128xbf16>, vector<16x128xf32> -> vector<16x128xf32>
    %c0_15 = arith.constant 0 : index
    %c0_16 = arith.constant 0 : index
    %16 = vector.load %arg5[%c0_15, %c0_16] : memref<1x128xf32, #tpu.memory_space<vmem>>, vector<1x128xf32>
    %17 = vector.broadcast %16 : vector<1x128xf32> to vector<16x128xf32>
    %18 = arith.addf %15, %17 : vector<16x128xf32>
    %cst_17 = arith.constant dense<0xFF800000> : vector<16xf32>
    %19 = vector.multi_reduction <maximumf>, %18, %cst_17 [1] : vector<16x128xf32> to vector<16xf32>
    %20 = vector.shape_cast %19 : vector<16xf32> to vector<16x1xf32>
    %21 = vector.broadcast %20 : vector<16x1xf32> to vector<16x128xf32>
    %22 = arith.subf %18, %21 : vector<16x128xf32>
    %23 = math.exp %22 : vector<16x128xf32>
    %cst_18 = arith.constant dense<0.000000e+00> : vector<16xf32>
    %24 = vector.multi_reduction <add>, %23, %cst_18 [1] : vector<16x128xf32> to vector<16xf32>
    %25 = vector.shape_cast %24 : vector<16xf32> to vector<16x1xf32>
    %26 = tpu.reciprocal %25 {approx = true} : vector<16x1xf32> -> vector<16x1xf32>
    %27 = vector.broadcast %26 : vector<16x1xf32> to vector<16x128xf32>
    %28 = arith.mulf %23, %27 : vector<16x128xf32>
    %29 = arith.truncf %28 : vector<16x128xf32> to vector<16x128xbf16>
    %c0_19 = arith.constant 0 : index
    %c0_20 = arith.constant 0 : index
    %30 = vector.load %arg6[%c0_19, %c0_20] : memref<16x128xbf16, #tpu.memory_space<vmem>>, vector<16x128xbf16>
    tpu.vector_store %arg6[%c0_19, %c0_20], %29 {strides = array<i32>} : memref<16x128xbf16, #tpu.memory_space<vmem>>, vector<16x128xbf16>,
    return
  }
  func.func @transform_0(%arg0: i32) -> (i32, i32) {
    %c0_i32 = arith.constant 0 : i32
    %c0_i32_0 = arith.constant 0 : i32
    return %arg0, %c0_i32 : i32, i32
  }
  func.func @transform_1(%arg0: i32) -> (i32, i32) {
    %c0_i32 = arith.constant 0 : i32
    %c0_i32_0 = arith.constant 0 : i32
    %c0_i32_1 = arith.constant 0 : i32
    return %c0_i32, %c0_i32_0 : i32, i32
  }
  func.func @transform_2(%arg0: i32) -> (i32, i32) {
    %c0_i32 = arith.constant 0 : i32
    %c0_i32_0 = arith.constant 0 : i32
    %c0_i32_1 = arith.constant 0 : i32
    return %c0_i32, %c0_i32_0 : i32, i32
  }
  func.func @transform_3(%arg0: i32) -> (i32, i32) {
    %c0_i32 = arith.constant 0 : i32
    %c0_i32_0 = arith.constant 0 : i32
    %c0_i32_1 = arith.constant 0 : i32
    return %c0_i32, %c0_i32_0 : i32, i32
  }
  func.func @transform_4(%arg0: i32) -> (i32, i32) {
    %c0_i32 = arith.constant 0 : i32
    %c0_i32_0 = arith.constant 0 : i32
    %c0_i32_1 = arith.constant 0 : i32
    return %c0_i32, %c0_i32_0 : i32, i32
  }
  func.func @transform_5(%arg0: i32) -> (i32, i32) {
    %c0_i32 = arith.constant 0 : i32
    %c0_i32_0 = arith.constant 0 : i32
    return %arg0, %c0_i32 : i32, i32
  }
}

</mosaic_0001>

<llo_original>
// kernel: tiny_model_forward.1
$region0: #{tiny_model_forward.1}
  #allocation0 [shape = 'u32[]', space=smem, size = 0x4, offset = 0x4, fixed_abs, tag = 'smem constant byte address 0x4 - core index']
  #allocation1 [shape = 'u32[144,128]{1,0:T(1,128)}', space=vmem, size = 0x12000, scoped, tag = 'internal scratch']
  #allocation2 [shape = 'bf16[16,128]{1,0:T(8,128)(2,1)}', space=vmem, size = 0x1000, scoped, tag = 'scratch operand']
  %s0 = inlined_call_operand.hbm [shape: f32[8,100], index: 0, kind: input, shape index: {}]
  %s1 = inlined_call_operand.hbm [shape: bf16[128,256], index: 1, kind: input, shape index: {}]
  %s2 = inlined_call_operand.vmem [shape: f32[1,256], index: 2, kind: input, shape index: {}]
  %s3 = inlined_call_operand.hbm [shape: bf16[256,128], index: 3, kind: input, shape index: {}]
  %s4 = inlined_call_operand.vmem [shape: f32[1,128], index: 4, kind: input, shape index: {}]
  %s5 = inlined_call_operand.vmem [shape: bf16[8,128], index: 5, kind: output, shape index: {}]
  %s6 = sld [smem:[#allocation0]]
  $region72: #{tiny_model_forward.1} parent=0
    _
  %s8 = ssub.s32 1, %s6
  %s9 = scalar_select 0, %s8, %s6
  $region1: #{tiny_model_forward.1} parent=0
    #allocation3 [shape = 'u8[8192]{0}', space=vmem, size = 0x2000, scoped, tag = 'input window, operand 0, single buffered']
    #allocation4 [shape = 's32[1]{0}', space=sflag, size = 0x4, scoped, tag = 'scoped memory for tiny_model_forward.1']
    #allocation5 [shape = 'u8[65536]{0}', space=vmem, size = 0x10000, scoped, tag = 'input window, operand 1, single buffered']
    #allocation6 [shape = 's32[1]{0}', space=sflag, size = 0x4, scoped, tag = 'scoped memory for tiny_model_forward.1']
    #allocation7 [shape = 'u8[65536]{0}', space=vmem, size = 0x10000, scoped, tag = 'input window, operand 3, single buffered']
    #allocation8 [shape = 'u8[4096]{0}', space=vmem, size = 0x1000, scoped, tag = 'output window, operand 0, single buffered']
    %10 = vsyncpa [#allocation4], 0
    %11 = vsyncpa [#allocation6], 0
    // Predicated region
    $region2: #{tiny_model_forward.1} parent=1 // pred_check
      _
    $region3: #{tiny_model_forward.1} parent=1 // pred_check_branch
      %13 = sbr.rel (0) target = $region5
    $region4: #{tiny_model_forward.1} parent=1 // pred_region
      %s15 = ssub.s32 256, 128
      %16 = vsyncadd [#allocation4], %s15
      %s17 = sshll.u32 [#allocation3], 4
      %s18 = int_to_ptr.vmem [resolvable:$true] %s17
      %23 = dma.hbm_to_vmem [thread:$0]  %s0, 128, %s18, [#allocation4], 128, 128, 8
    $region5: #{tiny_model_forward.1} parent=1 // pred_fallthru
      _
    // Predicated region
    $region6: #{tiny_model_forward.1} parent=1 // pred_check
      _
    $region7: #{tiny_model_forward.1} parent=1 // pred_check_branch
      %25 = sbr.rel (0) target = $region9
    $region8: #{tiny_model_forward.1} parent=1 // pred_region
      %s27 = ssub.s32 2048, 2048
      %28 = vsyncadd [#allocation6], %s27
      %s29 = sshll.u32 [#allocation5], 4
      %s30 = int_to_ptr.vmem [resolvable:$true] %s29
      %35 = dma.hbm_to_vmem [thread:$0]  %s1, 2048, %s30, [#allocation6], 128, 128, 8
    $region9: #{tiny_model_forward.1} parent=1 // pred_fallthru
      _
    // Predicated region
    $region10: #{tiny_model_forward.1} parent=1 // pred_check
      _
    $region11: #{tiny_model_forward.1} parent=1 // pred_check_branch
      %37 = sbr.rel (0) target = $region13
    $region12: #{tiny_model_forward.1} parent=1 // pred_region
      _
    $region13: #{tiny_model_forward.1} parent=1 // pred_fallthru
      _
    // Predicated region
    $region14: #{tiny_model_forward.1} parent=1 // pred_check
      _
    $region15: #{tiny_model_forward.1} parent=1 // pred_check_branch
      %39 = sbr.rel (0) target = $region17
    $region16: #{tiny_model_forward.1} parent=1 // pred_region
      %s41 = ssub.s32 2048, 2048
      %42 = vsyncadd [#allocation6], %s41
      %s43 = sshll.u32 [#allocation7], 4
      %s44 = int_to_ptr.vmem [resolvable:$true] %s43
      %49 = dma.hbm_to_vmem [thread:$0]  %s3, 2048, %s44, [#allocation6], 64, 64, 4
    $region17: #{tiny_model_forward.1} parent=1 // pred_fallthru
      _
    // Predicated region
    $region18: #{tiny_model_forward.1} parent=1 // pred_check
      _
    $region19: #{tiny_model_forward.1} parent=1 // pred_check_branch
      %51 = sbr.rel (0) target = $region21
    $region20: #{tiny_model_forward.1} parent=1 // pred_region
      _
    $region21: #{tiny_model_forward.1} parent=1 // pred_fallthru
      _
    // Predicated region
    $region22: #{tiny_model_forward.1} parent=1 // pred_check
      _
    $region23: #{tiny_model_forward.1} parent=1 // pred_check_branch
      %53 = sbr.rel (0) target = $region25
    $region24: #{tiny_model_forward.1} parent=1 // pred_region
      %54 = dma.done [#allocation4], 256
    $region25: #{tiny_model_forward.1} parent=1 // pred_fallthru
      _
    // Predicated region
    $region26: #{tiny_model_forward.1} parent=1 // pred_check
      _
    $region27: #{tiny_model_forward.1} parent=1 // pred_check_branch
      %56 = sbr.rel (0) target = $region29
    $region28: #{tiny_model_forward.1} parent=1 // pred_region
      %57 = dma.done [#allocation6], 2048
    $region29: #{tiny_model_forward.1} parent=1 // pred_fallthru
      _
    // Predicated region
    $region30: #{tiny_model_forward.1} parent=1 // pred_check
      _
    $region31: #{tiny_model_forward.1} parent=1 // pred_check_branch
      %59 = sbr.rel (0) target = $region33
    $region32: #{tiny_model_forward.1} parent=1 // pred_region
      %60 = dma.done [#allocation6], 2048
    $region33: #{tiny_model_forward.1} parent=1 // pred_fallthru
      _
    %vm62 = vcmask 1044256
    %63 = vst.msk [vmem:[#allocation2] sm:$0xf] %vm62, 0
    %64 = vst.msk [vmem:[#allocation2 + $0x4] sm:$0xf] %vm62, 0
    %v65 = vld [vmem:[#allocation3] sm:$0xff]
    %v66 = vld [vmem:[#allocation3 + $0x8] sm:$0xff]
    %v67 = vpack.c.bf16 %v66, %v65
    %v69 = vunpack.c.l.b16 %v67
    %v70 = vunpack.c.h.b16 %v67
    %v71 = vpack.c.b16 %v69, %v69
    %v72 = vpack.c.b16 %v70, %v70
    %vm75 = vcmask 814080
    %76 = vst.msk [vmem:[#allocation2] sm:$0xf] %vm75, %v71
    %77 = vst.msk [vmem:[#allocation2 + $0x4] sm:$0xf] %vm75, %v72
    %v78 = vld [vmem:[#allocation2] sm:$0xf]
    %v79 = vld [vmem:[#allocation2 + $0x4] sm:$0xf]
    %v80 = vld [vmem:[#allocation5] sm:$0xff]
    %v81 = vld [vmem:[#allocation5 + $0x8] sm:$0xff]
    %v82 = vld [vmem:[#allocation5 + $0x10] sm:$0xff]
    %v83 = vld [vmem:[#allocation5 + $0x18] sm:$0xff]
    %v84 = vld [vmem:[#allocation5 + $0x20] sm:$0xff]
    %v85 = vld [vmem:[#allocation5 + $0x28] sm:$0xff]
    %v86 = vld [vmem:[#allocation5 + $0x30] sm:$0xff]
    %v87 = vld [vmem:[#allocation5 + $0x38] sm:$0xff]
    %v88 = vld [vmem:[#allocation5 + $0x40] sm:$0xff]
    %v89 = vld [vmem:[#allocation5 + $0x48] sm:$0xff]
    %v90 = vld [vmem:[#allocation5 + $0x50] sm:$0xff]
    %v91 = vld [vmem:[#allocation5 + $0x58] sm:$0xff]
    %v92 = vld [vmem:[#allocation5 + $0x60] sm:$0xff]
    %v93 = vld [vmem:[#allocation5 + $0x68] sm:$0xff]
    %v94 = vld [vmem:[#allocation5 + $0x70] sm:$0xff]
    %v95 = vld [vmem:[#allocation5 + $0x78] sm:$0xff]
    %v96 = vld [vmem:[%s2] sm:$0x3]
    %v98 = vlaneseq
    %v99 = vshrl.u32 %v98, 7
    %v100 = vsub.s32 0, %v99
    %v101 = vrot.slane %v96, %v100
    %v102 = vlaneseq
    %v103 = vshrl.u32 %v102, 7
    %v104 = vsub.s32 1, %v103
    %v105 = vrot.slane %v96, %v104
    %v110 = vunpack.c.l.b16 %v78
    %v111 = vunpack.c.l.b16 %v79
    %v112 = vpack.c.b16 %v111, %v110
    %v130 = vunpack.c.l.b16 %v80
    %v131 = vunpack.c.h.b16 %v80
    %v132 = vunpack.c.l.b16 %v81
    %v133 = vunpack.c.h.b16 %v81
    %v134 = vunpack.c.l.b16 %v82
    %v135 = vunpack.c.h.b16 %v82
    %v136 = vunpack.c.l.b16 %v83
    %v137 = vunpack.c.h.b16 %v83
    %v138 = vunpack.c.l.b16 %v84
    %v139 = vunpack.c.h.b16 %v84
    %v140 = vunpack.c.l.b16 %v85
    %v141 = vunpack.c.h.b16 %v85
    %v142 = vunpack.c.l.b16 %v86
    %v143 = vunpack.c.h.b16 %v86
    %v144 = vunpack.c.l.b16 %v87
    %v145 = vunpack.c.h.b16 %v87
    %v146 = vunpack.c.l.b16 %v88
    %v147 = vunpack.c.h.b16 %v88
    %v148 = vunpack.c.l.b16 %v89
    %v149 = vunpack.c.h.b16 %v89
    %v150 = vunpack.c.l.b16 %v90
    %v151 = vunpack.c.h.b16 %v90
    %v152 = vunpack.c.l.b16 %v91
    %v153 = vunpack.c.h.b16 %v91
    %v154 = vunpack.c.l.b16 %v92
    %v155 = vunpack.c.h.b16 %v92
    %v156 = vunpack.c.l.b16 %v93
    %v157 = vunpack.c.h.b16 %v93
    %v158 = vunpack.c.l.b16 %v94
    %v159 = vunpack.c.h.b16 %v94
    %v160 = vunpack.c.l.b16 %v95
    %v161 = vunpack.c.h.b16 %v95
    %v162 = vpack.c.b16 %v132, %v130
    %v163 = vpack.c.b16 %v133, %v131
    %v164 = vpack.c.b16 %v136, %v134
    %v165 = vpack.c.b16 %v137, %v135
    %v166 = vpack.c.b16 %v140, %v138
    %v167 = vpack.c.b16 %v141, %v139
    %v168 = vpack.c.b16 %v144, %v142
    %v169 = vpack.c.b16 %v145, %v143
    %v170 = vpack.c.b16 %v148, %v146
    %v171 = vpack.c.b16 %v149, %v147
    %v172 = vpack.c.b16 %v152, %v150
    %v173 = vpack.c.b16 %v153, %v151
    %v174 = vpack.c.b16 %v156, %v154
    %v175 = vpack.c.b16 %v157, %v155
    %v176 = vpack.c.b16 %v160, %v158
    %v177 = vpack.c.b16 %v161, %v159
    %194 = vmatprep.subr.bf16.mxu0 %v177
    %195 = vmatpush1.bf16.msra.mxu0 %v176
    %196 = vmatprep.subr.bf16.mxu0 %v175
    %197 = vmatpush1.bf16.msra.mxu0 %v174
    %198 = vmatprep.subr.bf16.mxu0 %v173
    %199 = vmatpush1.bf16.msra.mxu0 %v172
    %200 = vmatprep.subr.bf16.mxu0 %v171
    %201 = vmatpush1.bf16.msra.mxu0 %v170
    %202 = vmatprep.subr.bf16.mxu0 %v169
    %203 = vmatpush1.bf16.msra.mxu0 %v168
    %204 = vmatprep.subr.bf16.mxu0 %v167
    %205 = vmatpush1.bf16.msra.mxu0 %v166
    %206 = vmatprep.subr.bf16.mxu0 %v165
    %207 = vmatpush1.bf16.msra.mxu0 %v164
    %208 = vmatprep.subr.bf16.mxu0 %v163
    %209 = vmatpush1.bf16.msra.mxu0 %v162
    %210 = vmatprep.subr.bf16.mxu0 0
    %211 = vmatpush2.bf16.msra.mxu0 0
    %212 = vmatprep.subr.bf16.mxu0 0
    %213 = vmatpush2.bf16.msra.mxu0 0
    %214 = vmatprep.subr.bf16.mxu0 0
    %215 = vmatpush2.bf16.msra.mxu0 0
    %216 = vmatprep.subr.bf16.mxu0 0
    %217 = vmatpush2.bf16.msra.mxu0 0
    %218 = vmatprep.subr.bf16.mxu0 0
    %219 = vmatpush2.bf16.msra.mxu0 0
    %220 = vmatprep.subr.bf16.mxu0 0
    %221 = vmatpush2.bf16.msra.mxu0 0
    %222 = vmatprep.subr.bf16.mxu0 0
    %223 = vmatpush2.bf16.msra.mxu0 0
    %224 = vmatprep.subr.bf16.mxu0 0
    %225 = vmatpush2.bf16.msra.mxu0 0
    %226 = vmatprep.mubr.bf16.mxu0 0
    %227 = vmatmul.mubr.bf16.gmra.mxu0 %v112
    %v228 = vpop.f32.mrf.mxu0
    %v229 = vadd.f32 %v101, %v228
    %v230 = vpop.f32.mrf.mxu0
    %v231 = vadd.f32 %v105, %v230
    %v232 = vpop.f32.mrf.mxu0
    %v233 = vadd.f32 %v101, %v232
    %v234 = vpop.f32.mrf.mxu0
    %v235 = vadd.f32 %v105, %v234
    %236 = vdwg.mxu0
    %v237 = vmax.f32 %v229, 0.0
    %v238 = vmax.f32 %v231, 0.0
    %v239 = vmax.f32 %v233, 0.0
    %v240 = vmax.f32 %v235, 0.0
    %v241 = vpack.c.bf16 %v239, %v237
    %v242 = vpack.c.bf16 %v240, %v238
    %v243 = vld [vmem:[#allocation7] sm:$0xf]
    %v244 = vld [vmem:[#allocation7 + $0x4] sm:$0xf]
    %v245 = vld [vmem:[#allocation7 + $0x8] sm:$0xf]
    %v246 = vld [vmem:[#allocation7 + $0xc] sm:$0xf]
    %v247 = vld [vmem:[#allocation7 + $0x10] sm:$0xf]
    %v248 = vld [vmem:[#allocation7 + $0x14] sm:$0xf]
    %v249 = vld [vmem:[#allocation7 + $0x18] sm:$0xf]
    %v250 = vld [vmem:[#allocation7 + $0x1c] sm:$0xf]
    %v251 = vld [vmem:[#allocation7 + $0x20] sm:$0xf]
    %v252 = vld [vmem:[#allocation7 + $0x24] sm:$0xf]
    %v253 = vld [vmem:[#allocation7 + $0x28] sm:$0xf]
    %v254 = vld [vmem:[#allocation7 + $0x2c] sm:$0xf]
    %v255 = vld [vmem:[#allocation7 + $0x30] sm:$0xf]
    %v256 = vld [vmem:[#allocation7 + $0x34] sm:$0xf]
    %v257 = vld [vmem:[#allocation7 + $0x38] sm:$0xf]
    %v258 = vld [vmem:[#allocation7 + $0x3c] sm:$0xf]
    %v259 = vld [vmem:[#allocation7 + $0x40] sm:$0xf]
    %v260 = vld [vmem:[#allocation7 + $0x44] sm:$0xf]
    %v261 = vld [vmem:[#allocation7 + $0x48] sm:$0xf]
    %v262 = vld [vmem:[#allocation7 + $0x4c] sm:$0xf]
    %v263 = vld [vmem:[#allocation7 + $0x50] sm:$0xf]
    %v264 = vld [vmem:[#allocation7 + $0x54] sm:$0xf]
    %v265 = vld [vmem:[#allocation7 + $0x58] sm:$0xf]
    %v266 = vld [vmem:[#allocation7 + $0x5c] sm:$0xf]
    %v267 = vld [vmem:[#allocation7 + $0x60] sm:$0xf]
    %v268 = vld [vmem:[#allocation7 + $0x64] sm:$0xf]
    %v269 = vld [vmem:[#allocation7 + $0x68] sm:$0xf]
    %v270 = vld [vmem:[#allocation7 + $0x6c] sm:$0xf]
    %v271 = vld [vmem:[#allocation7 + $0x70] sm:$0xf]
    %v272 = vld [vmem:[#allocation7 + $0x74] sm:$0xf]
    %v273 = vld [vmem:[#allocation7 + $0x78] sm:$0xf]
    %v274 = vld [vmem:[#allocation7 + $0x7c] sm:$0xf]
    %v275 = vld [vmem:[%s4] sm:$0x1]
    %v277 = vlaneseq
    %v278 = vshrl.u32 %v277, 7
    %v279 = vsub.s32 0, %v278
    %v280 = vrot.slane %v275, %v279
    %v314 = vunpack.c.l.b16 %v243
    %v315 = vunpack.c.l.b16 %v244
    %v316 = vunpack.c.l.b16 %v245
    %v317 = vunpack.c.l.b16 %v246
    %v318 = vunpack.c.l.b16 %v247
    %v319 = vunpack.c.l.b16 %v248
    %v320 = vunpack.c.l.b16 %v249
    %v321 = vunpack.c.l.b16 %v250
    %v322 = vunpack.c.l.b16 %v251
    %v323 = vunpack.c.l.b16 %v252
    %v324 = vunpack.c.l.b16 %v253
    %v325 = vunpack.c.l.b16 %v254
    %v326 = vunpack.c.l.b16 %v255
    %v327 = vunpack.c.l.b16 %v256
    %v328 = vunpack.c.l.b16 %v257
    %v329 = vunpack.c.l.b16 %v258
    %v330 = vunpack.c.l.b16 %v259
    %v331 = vunpack.c.l.b16 %v260
    %v332 = vunpack.c.l.b16 %v261
    %v333 = vunpack.c.l.b16 %v262
    %v334 = vunpack.c.l.b16 %v263
    %v335 = vunpack.c.l.b16 %v264
    %v336 = vunpack.c.l.b16 %v265
    %v337 = vunpack.c.l.b16 %v266
    %v338 = vunpack.c.l.b16 %v267
    %v339 = vunpack.c.l.b16 %v268
    %v340 = vunpack.c.l.b16 %v269
    %v341 = vunpack.c.l.b16 %v270
    %v342 = vunpack.c.l.b16 %v271
    %v343 = vunpack.c.l.b16 %v272
    %v344 = vunpack.c.l.b16 %v273
    %v345 = vunpack.c.l.b16 %v274
    %v346 = vpack.c.b16 %v315, %v314
    %v347 = vpack.c.b16 %v317, %v316
    %v348 = vpack.c.b16 %v319, %v318
    %v349 = vpack.c.b16 %v321, %v320
    %v350 = vpack.c.b16 %v323, %v322
    %v351 = vpack.c.b16 %v325, %v324
    %v352 = vpack.c.b16 %v327, %v326
    %v353 = vpack.c.b16 %v329, %v328
    %v354 = vpack.c.b16 %v331, %v330
    %v355 = vpack.c.b16 %v333, %v332
    %v356 = vpack.c.b16 %v335, %v334
    %v357 = vpack.c.b16 %v337, %v336
    %v358 = vpack.c.b16 %v339, %v338
    %v359 = vpack.c.b16 %v341, %v340
    %v360 = vpack.c.b16 %v343, %v342
    %v361 = vpack.c.b16 %v345, %v344
    %378 = vmatprep.subr.bf16.mxu0 0
    %379 = vmatpush1.bf16.msra.mxu0 %v353
    %380 = vmatprep.subr.bf16.mxu0 0
    %381 = vmatpush1.bf16.msra.mxu0 %v352
    %382 = vmatprep.subr.bf16.mxu0 0
    %383 = vmatpush1.bf16.msra.mxu0 %v351
    %384 = vmatprep.subr.bf16.mxu0 0
    %385 = vmatpush1.bf16.msra.mxu0 %v350
    %386 = vmatprep.subr.bf16.mxu0 0
    %387 = vmatpush1.bf16.msra.mxu0 %v349
    %388 = vmatprep.subr.bf16.mxu0 0
    %389 = vmatpush1.bf16.msra.mxu0 %v348
    %390 = vmatprep.subr.bf16.mxu0 0
    %391 = vmatpush1.bf16.msra.mxu0 %v347
    %392 = vmatprep.subr.bf16.mxu0 0
    %393 = vmatpush1.bf16.msra.mxu0 %v346
    %394 = vmatprep.subr.bf16.mxu0 0
    %395 = vmatpush2.bf16.msra.mxu0 %v361
    %396 = vmatprep.subr.bf16.mxu0 0
    %397 = vmatpush2.bf16.msra.mxu0 %v360
    %398 = vmatprep.subr.bf16.mxu0 0
    %399 = vmatpush2.bf16.msra.mxu0 %v359
    %400 = vmatprep.subr.bf16.mxu0 0
    %401 = vmatpush2.bf16.msra.mxu0 %v358
    %402 = vmatprep.subr.bf16.mxu0 0
    %403 = vmatpush2.bf16.msra.mxu0 %v357
    %404 = vmatprep.subr.bf16.mxu0 0
    %405 = vmatpush2.bf16.msra.mxu0 %v356
    %406 = vmatprep.subr.bf16.mxu0 0
    %407 = vmatpush2.bf16.msra.mxu0 %v355
    %408 = vmatprep.subr.bf16.mxu0 0
    %409 = vmatpush2.bf16.msra.mxu0 %v354
    %410 = vmatprep.mubr.bf16.mxu0 %v242
    %411 = vmatmul.mubr.bf16.gmra.mxu0 %v241
    %v412 = vpop.f32.mrf.mxu0
    %v413 = vadd.f32 %v280, %v412
    %v414 = vpop.f32.mrf.mxu0
    %v415 = vpop.f32.mrf.mxu0
    %v416 = vadd.f32 %v280, %v415
    %v417 = vpop.f32.mrf.mxu0
    %418 = vdwg.mxu0
    %419 = vmax.xlane.f32.xlu0 %v413
    %v420 = vpop.xlane.xlu0 %419
    %421 = vmax.xlane.f32.xlu0 %v416
    %v422 = vpop.xlane.xlu0 %421
    %v423 = vsub.f32 %v413, %v420
    %v424 = vsub.f32 %v416, %v422
    %v425 = vmul.f32 %v423, 1.442695
    %v426 = vpow.pop %v425
    %v427 = vmul.f32 %v424, 1.442695
    %v428 = vpow.pop %v427
    %429 = vadd.xlane.f32.xlu0 %v426
    %v430 = vpop.xlane.xlu0 %429
    %431 = vadd.xlane.f32.xlu0 %v428
    %v432 = vpop.xlane.xlu0 %431
    %v433 = vrcp.pop %v430
    %v434 = vrcp.pop %v432
    %v435 = vmul.f32 %v426, %v433
    %v436 = vmul.f32 %v428, %v434
    %v437 = vpack.c.bf16 %v436, %v435
    %v439 = vunpack.c.l.b16 %v437
    %v440 = vunpack.c.h.b16 %v437
    %v441 = vpack.c.b16 %v439, %v439
    %v442 = vpack.c.b16 %v440, %v440
    %445 = vst [vmem:[#allocation8] sm:$0xf] %v441
    %446 = vst [vmem:[#allocation8 + $0x4] sm:$0xf] %v442
    // Predicated region
    $region34: #{tiny_model_forward.1} parent=1 // pred_check
      _
    $region35: #{tiny_model_forward.1} parent=1 // pred_check_branch
      %448 = sbr.rel (0) target = $region37
    $region36: #{tiny_model_forward.1} parent=1 // pred_region
      // Predicated region
      $region38: #{tiny_model_forward.1} parent=36 // pred_check
        _
      $region39: #{tiny_model_forward.1} parent=36 // pred_check_branch
        %450 = sbr.rel (0) target = $region41
      $region40: #{tiny_model_forward.1} parent=36 // pred_region
        // Predicated region
        $region42: #{tiny_model_forward.1} parent=40 // pred_check
          _
        $region43: #{tiny_model_forward.1} parent=40 // pred_check_branch
          %452 = sbr.rel target = $region45
        $region44: #{tiny_model_forward.1} parent=40 // pred_region
          // Predicated region
          $region57: #{tiny_model_forward.1} parent=44 // pred_check
            _
          $region58: #{tiny_model_forward.1} parent=44 // pred_check_branch
            %468 = sbr.rel (0) target = $region60
          $region59: #{tiny_model_forward.1} parent=44 // pred_region
            %s470 = ssub.s32 16, 1
            loop: start=0, step=1, limit=1
            $region61: #{tiny_model_forward.1} parent=59 // loop_pre_header
              _
            $region62: #{tiny_model_forward.1} parent=59 // loop_header
              %s472 = sphi 0, %s476
              %p473 = scmp.ge.s32.totalorder %s472, 1
              %s477 = sphi [#allocation8], [#allocation8]
              %s478 = sphi %s5, %s5
            $region63: #{tiny_model_forward.1} parent=59 // loop_header_branch
              %475 = sbr.rel (%p473) target = $region67
            $region64: #{tiny_model_forward.1} parent=59 // loop_body
              %v479 = vld [vmem:[%s477] sm:%s470]
              %480 = vst [vmem:[%s478] sm:%s470] %v479
            $region65: #{tiny_model_forward.1} parent=59 // loop_footer
              %s476 = sadd.s32 1, %s472
            $region66: #{tiny_model_forward.1} parent=59 // loop_footer_branch
              %471 = sbr.rel target = $region62
            $region67: #{tiny_model_forward.1} parent=59 // loop_exit
              _
          $region60: #{tiny_model_forward.1} parent=44 // pred_fallthru
            _
        $region45: #{tiny_model_forward.1} parent=40 // pred_fallthru
          _
        // Predicated region
        $region46: #{tiny_model_forward.1} parent=40 // pred_check
          _
        $region47: #{tiny_model_forward.1} parent=40 // pred_check_branch
          %454 = sbr.rel (0) target = $region49
        $region48: #{tiny_model_forward.1} parent=40 // pred_region
          %s456 = ssub.s32 16, 1
          loop: start=0, step=1, limit=1
          $region50: #{tiny_model_forward.1} parent=48 // loop_pre_header
            _
          $region51: #{tiny_model_forward.1} parent=48 // loop_header
            %s458 = sphi 0, %s462
            %p459 = scmp.ge.s32.totalorder %s458, 1
            %s463 = sphi [#allocation8], [#allocation8]
            %s464 = sphi %s5, %s5
          $region52: #{tiny_model_forward.1} parent=48 // loop_header_branch
            %461 = sbr.rel (%p459) target = $region56
          $region53: #{tiny_model_forward.1} parent=48 // loop_body
            %v465 = vld [vmem:[%s463] sm:%s456]
            %466 = vst [vmem:[%s464] sm:%s456] %v465
          $region54: #{tiny_model_forward.1} parent=48 // loop_footer
            %s462 = sadd.s32 1, %s458
          $region55: #{tiny_model_forward.1} parent=48 // loop_footer_branch
            %457 = sbr.rel target = $region51
          $region56: #{tiny_model_forward.1} parent=48 // loop_exit
            _
        $region49: #{tiny_model_forward.1} parent=40 // pred_fallthru
          _
      $region41: #{tiny_model_forward.1} parent=36 // pred_fallthru
        _
      %481 = vnop
    $region37: #{tiny_model_forward.1} parent=1 // pred_fallthru
      _
    // Predicated region
    $region68: #{tiny_model_forward.1} parent=1 // pred_check
      _
    $region69: #{tiny_model_forward.1} parent=1 // pred_check_branch
      %483 = sbr.rel (0) target = $region71
    $region70: #{tiny_model_forward.1} parent=1 // pred_region
      _
    $region71: #{tiny_model_forward.1} parent=1 // pred_fallthru
      _
    %484 = vsyncpa [#allocation4], 1
    %485 = vsyncpa [#allocation6], 1

</llo_original>
